<compile_context>
chip_gen: v6e
topology: v6e:2x2x1
jax: 0.10.0
libtpu: 0.0.40
codegen_flags: <defaults>
</compile_context>

<pallas_src>
import functools
import numpy as np
import jax
import jax.numpy as jnp
from jax.experimental import pallas as pl
from jax.experimental.pallas import tpu as pltpu


def _pick_tile(dim, target, align):
    """Largest multiple of `align` that divides `dim` and is <= target."""
    if dim <= target:
        return dim
    t = (target // align) * align
    while t >= align:
        if dim % t == 0:
            return t
        t -= align
    return dim


# ---------------------------------------------------------------------------
# Tiled linear:  y = x @ w + b   (bf16 MXU inputs, f32 accumulate)
# ---------------------------------------------------------------------------
def _linear_kernel(x_ref, w_ref, b_ref, o_ref):
    acc = jnp.dot(x_ref[...].astype(jnp.bfloat16),
                  w_ref[...].astype(jnp.bfloat16),
                  preferred_element_type=jnp.float32)
    o_ref[...] = (acc + b_ref[...]).astype(o_ref.dtype)


def linear_pallas(x2d, w, b, *, tm_target=256, tn_target=512):
    M, K = x2d.shape
    N = w.shape[1]
    tm = _pick_tile(M, tm_target, 8)
    tn = _pick_tile(N, tn_target, 128)
    grid = (M // tm, N // tn)
    return pl.pallas_call(
        _linear_kernel,
        out_shape=jax.ShapeDtypeStruct((M, N), x2d.dtype),
        grid=grid,
        in_specs=[
            pl.BlockSpec((tm, K), lambda i, j: (i, 0)),
            pl.BlockSpec((K, tn), lambda i, j: (0, j)),
            pl.BlockSpec((1, tn), lambda i, j: (0, j)),
        ],
        out_specs=pl.BlockSpec((tm, tn), lambda i, j: (i, j)),
        compiler_params=pltpu.CompilerParams(
            dimension_semantics=("parallel", "parallel")),
    )(x2d, w, b.reshape(1, N))


# ---------------------------------------------------------------------------
# Attention kernel: one grid step per batch, all heads per step.
#   qkv_ref : (1, S, 3C)   lane-dense qkv activations for this batch
#   rhe_ref : (H, S, hd)   key-expanded height rel-pos table (shared)
#   rw_ref  : (W, W, hd)   width rel-pos table (shared)
#   o_ref   : (1, S, C)    lane-dense output, heads concatenated along C
# ---------------------------------------------------------------------------
def _attn_kernel(qkv_ref, rhe_ref, rw_ref, o_ref, *,
                 scale, num_heads, head_dim, H, W):
    S = H * W
    hd = head_dim
    C = num_heads * hd

    qkv = qkv_ref[0]                                   # (S, 3C) f32
    rhe = rhe_ref[...].astype(jnp.bfloat16)            # (H, S, hd)
    rw = rw_ref[...]                                   # (W, W, hd) f32

    outs = []
    for h in range(num_heads):                         # static unrolled loop
        q = qkv[:, h * hd:(h + 1) * hd]                # (S, hd)
        k = qkv[:, C + h * hd:C + (h + 1) * hd]        # (S, hd)
        v = qkv[:, 2 * C + h * hd:2 * C + (h + 1) * hd]

        # scores: (q*scale) @ k^T on the MXU, bf16 in / f32 acc, lane dim = S
        attn = jax.lax.dot_general(
            (q * scale).astype(jnp.bfloat16), k.astype(jnp.bfloat16),
            dimension_numbers=(((1,), (1,)), ((), ())),
            preferred_element_type=jnp.float32)        # (S, S)

        # ---- decomposed relative-position bias (no (S,S,hd) table) --------
        q_r = q.reshape(H, W, hd)                      # unscaled q (matches ref)
        # height term: batched MXU matmul against the key-expanded table,
        # result is already lane-dense over the full key axis.
        bias_h = jnp.einsum('hwc,hkc->hwk',
                            q_r.astype(jnp.bfloat16), rhe,
                            preferred_element_type=jnp.float32)   # (H, W, S)
        # width term: tiny VPU contraction (H*W*W*hd elems), tiled over key-h.
        rel_w = jnp.sum(q_r[:, :, None, :] * rw[None, :, :, :],
                        axis=-1)                                   # (H, W, W)
        bias_w = jnp.concatenate([rel_w.reshape(S, W)] * H, axis=1)  # (S, S)

        attn = attn + bias_h.reshape(S, S) + bias_w

        # softmax (f32); normalization via approx reciprocal on the EUP
        attn = attn - jnp.max(attn, axis=-1, keepdims=True)
        p = jnp.exp(attn)
        p = p * pl.reciprocal(jnp.sum(p, axis=-1, keepdims=True), approx=True)

        outs.append(jax.lax.dot_general(
            p.astype(jnp.bfloat16), v.astype(jnp.bfloat16),
            dimension_numbers=(((1,), (0,)), ((), ())),
            preferred_element_type=jnp.float32))       # (S, hd)

    # heads concatenated along lanes -> (S, C): single lane-dense store in the
    # (B, H*W, C) layout consumed by the output projection (no transpose).
    o_ref[0] = jnp.concatenate(outs, axis=-1).astype(o_ref.dtype)


def attn_pallas(qkv3, rhe, rw, *, scale, num_heads, head_dim, H, W):
    B, S, C3 = qkv3.shape
    C = num_heads * head_dim
    kernel = functools.partial(_attn_kernel, scale=scale, num_heads=num_heads,
                               head_dim=head_dim, H=H, W=W)
    return pl.pallas_call(
        kernel,
        out_shape=jax.ShapeDtypeStruct((B, S, C), qkv3.dtype),
        grid=(B,),
        in_specs=[
            pl.BlockSpec((1, S, C3), lambda b: (b, 0, 0)),
            pl.BlockSpec((H, S, head_dim), lambda b: (0, 0, 0)),
            pl.BlockSpec((W, W, head_dim), lambda b: (0, 0, 0)),
        ],
        out_specs=pl.BlockSpec((1, S, C), lambda b: (b, 0, 0)),
        compiler_params=pltpu.CompilerParams(dimension_semantics=("parallel",)),
    )(qkv3, rhe, rw)


# ---------------------------------------------------------------------------
# Module forward (glue in JAX, hot path in Pallas)
# ---------------------------------------------------------------------------
def attention_forward(x, w_qkv, b_qkv, w_proj, b_proj,
                      rel_pos_h, rel_pos_w, num_heads):
    B, H, W, C = x.shape
    S = H * W
    hd = C // num_heads
    scale = hd ** (-0.5)

    # qkv projection (tiled Pallas matmul).  The (B*S, 3C) result is consumed
    # directly by the attention kernel (per-head columns sliced in-kernel), so
    # no head-split transpose / HBM round trip of the activations is needed.
    qkv = linear_pallas(x.reshape(B * S, C), w_qkv, b_qkv)        # (B*S, 3C)
    qkv3 = qkv.reshape(B, S, 3 * C)

    # relative-position lookup tables (pure indexing; q_size == k_size so the
    # F.interpolate resize branch of get_rel_pos is never taken here)
    # TODO(synk): linear-interpolation resize branch of get_rel_pos not
    # implemented (only needed when rel_pos length != 2*size-1).
    idx_h = jnp.arange(H)[:, None] - jnp.arange(H)[None, :] + (H - 1)
    idx_w = jnp.arange(W)[:, None] - jnp.arange(W)[None, :] + (W - 1)
    Rh = rel_pos_h[idx_h]                                         # (H, H, hd)
    Rw = rel_pos_w[idx_w]                                         # (W, W, hd)
    # key-expanded height table (H, S, hd): H x smaller than the old (S,S,hd)
    # Rfull and lets the kernel compute the height bias as one lane-dense MXU
    # batched matmul with no in-kernel relayout.
    Rh_e = jnp.repeat(Rh, W, axis=1)                              # (H, S, hd)

    # attention (Pallas; one grid step per batch, all heads per step)
    o = attn_pallas(qkv3, Rh_e, Rw, scale=scale, num_heads=num_heads,
                    head_dim=hd, H=H, W=W)                        # (B, S, C)

    # output projection (tiled Pallas matmul); o is already (B, S, C) so no
    # head-merge transpose is needed.
    out = linear_pallas(o.reshape(B * S, C), w_proj, b_proj).reshape(B, H, W, C)
    return out


# ---------------------------------------------------------------------------
# Pure-JAX reference (mirror of the PyTorch forward) for validation
# ---------------------------------------------------------------------------
def attention_ref(x, w_qkv, b_qkv, w_proj, b_proj, rel_pos_h, rel_pos_w, num_heads):
    B, H, W, C = x.shape
    S = H * W
    hd = C // num_heads
    scale = hd ** (-0.5)
    qkv = x.reshape(B, S, C) @ w_qkv + b_qkv
    qkv = (qkv.reshape(B, S, 3, num_heads, hd)
              .transpose(2, 0, 3, 1, 4)
              .reshape(3, B * num_heads, S, hd))
    q, k, v = qkv[0], qkv[1], qkv[2]
    attn = (q * scale) @ jnp.swapaxes(k, -2, -1)
    idx_h = jnp.arange(H)[:, None] - jnp.arange(H)[None, :] + (H - 1)
    idx_w = jnp.arange(W)[:, None] - jnp.arange(W)[None, :] + (W - 1)
    Rh, Rw = rel_pos_h[idx_h], rel_pos_w[idx_w]
    r_q = q.reshape(B * num_heads, H, W, hd)
    rel_h = jnp.einsum('bhwc,hkc->bhwk', r_q, Rh)
    rel_w = jnp.einsum('bhwc,wkc->bhwk', r_q, Rw)
    attn = (attn.reshape(B * num_heads, H, W, H, W)
            + rel_h[..., :, None] + rel_w[..., None, :]).reshape(B * num_heads, S, S)
    attn = jax.nn.softmax(attn, axis=-1)
    o = (attn @ v).reshape(B, num_heads, H, W, hd).transpose(0, 2, 3, 1, 4).reshape(B, S, C)
    return (o @ w_proj + b_proj).reshape(B, H, W, C)


# ---------------------------------------------------------------------------
if __name__ == "__main__":
    B, H, W, dim, num_heads = 2, 16, 16, 32, 4
    hd = dim // num_heads

    key = jax.random.PRNGKey(0)
    k1, k2, k3, k4, k5, k6, k7 = jax.random.split(key, 7)
    x = jax.random.normal(k1, (B, H, W, dim), jnp.float32)
    # deterministic synthetic parameters (nn.Linear(dim, 3*dim) / nn.Linear(dim, dim))
    w_qkv = jax.random.normal(k2, (dim, 3 * dim), jnp.float32) * 0.05
    b_qkv = jax.random.normal(k3, (3 * dim,), jnp.float32) * 0.05
    w_proj = jax.random.normal(k4, (dim, dim), jnp.float32) * 0.05
    b_proj = jax.random.normal(k5, (dim,), jnp.float32) * 0.05
    # use_rel_pos=True path, input_size=(H, W); random (not zero) init so the
    # rel-pos contribution actually gets exercised.
    rel_pos_h = jax.random.normal(k6, (2 * H - 1, hd), jnp.float32) * 0.02
    rel_pos_w = jax.random.normal(k7, (2 * W - 1, hd), jnp.float32) * 0.02

    out = attention_forward(x, w_qkv, b_qkv, w_proj, b_proj,
                            rel_pos_h, rel_pos_w, num_heads)
    out = jax.block_until_ready(out)

    ref = attention_ref(x, w_qkv, b_qkv, w_proj, b_proj,
                        rel_pos_h, rel_pos_w, num_heads)
    assert out.shape == (B, H, W, dim)
    # bf16 MXU inputs (f32 accumulate) -> tolerance loosened vs. pure-f32 ref.
    assert np.allclose(np.asarray(out), np.asarray(ref), atol=1e-2, rtol=1e-2), \
        "Pallas output does not match JAX reference"
    print("KERNEL_OK")
</pallas_src>

<mosaic_0001>
module attributes {stable_mosaic.version = 11 : i64} {
  func.func @_linear_kernel(%arg0: i32, %arg1: i32, %arg2: memref<256x32xf32, #tpu.memory_space<vmem>>, %arg3: memref<32x96xf32, #tpu.memory_space<vmem>>, %arg4: memref<1x96xf32, #tpu.memory_space<vmem>>, %arg5: memref<256x96xf32, #tpu.memory_space<vmem>>) attributes {dimension_semantics = [#tpu.dimension_semantics<parallel>, #tpu.dimension_semantics<parallel>], iteration_bounds = array<i64: 2, 1>, scalar_prefetch = 0 : i64, scratch_operands = 0 : i64, tpu.core_type = #tpu.core_type<tc>, window_params = [{transform_indices = @transform_0, window_bounds = array<i64: 256, 32>}, {transform_indices = @transform_1, window_bounds = array<i64: 32, 96>}, {transform_indices = @transform_2, window_bounds = array<i64: 1, 96>}, {transform_indices = @transform_3, window_bounds = array<i64: 256, 96>}]} {
    %c0 = arith.constant 0 : index
    %c0_0 = arith.constant 0 : index
    %0 = vector.load %arg2[%c0, %c0_0] : memref<256x32xf32, #tpu.memory_space<vmem>>, vector<256x32xf32>
    %1 = arith.truncf %0 : vector<256x32xf32> to vector<256x32xbf16>
    %c0_1 = arith.constant 0 : index
    %c0_2 = arith.constant 0 : index
    %2 = vector.load %arg3[%c0_1, %c0_2] : memref<32x96xf32, #tpu.memory_space<vmem>>, vector<32x96xf32>
    %3 = arith.truncf %2 : vector<32x96xf32> to vector<32x96xbf16>
    %cst = arith.constant dense<0.000000e+00> : vector<256x96xf32>
    %4 = tpu.matmul %1, %3, %cst {dimension_numbers = #tpu.dot_dimension_numbers<[1], [0], [0], [1], [0, 0, 1, 1], [], []>} : vector<256x32xbf16>, vector<32x96xbf16>, vector<256x96xf32> -> vector<256x96xf32>
    %c0_3 = arith.constant 0 : index
    %c0_4 = arith.constant 0 : index
    %5 = vector.load %arg4[%c0_3, %c0_4] : memref<1x96xf32, #tpu.memory_space<vmem>>, vector<1x96xf32>
    %6 = vector.broadcast %5 : vector<1x96xf32> to vector<256x96xf32>
    %7 = arith.addf %4, %6 : vector<256x96xf32>
    %c0_5 = arith.constant 0 : index
    %c0_6 = arith.constant 0 : index
    %8 = vector.load %arg5[%c0_5, %c0_6] : memref<256x96xf32, #tpu.memory_space<vmem>>, vector<256x96xf32>
    tpu.vector_store %arg5[%c0_5, %c0_6], %7 {strides = array<i32>} : memref<256x96xf32, #tpu.memory_space<vmem>>, vector<256x96xf32>,
    return
  }
  func.func @transform_0(%arg0: i32, %arg1: i32) -> (i32, i32) {
    %c0_i32 = arith.constant 0 : i32
    %c0_i32_0 = arith.constant 0 : i32
    return %arg0, %c0_i32 : i32, i32
  }
  func.func @transform_1(%arg0: i32, %arg1: i32) -> (i32, i32) {
    %c0_i32 = arith.constant 0 : i32
    %c0_i32_0 = arith.constant 0 : i32
    return %c0_i32, %arg1 : i32, i32
  }
  func.func @transform_2(%arg0: i32, %arg1: i32) -> (i32, i32) {
    %c0_i32 = arith.constant 0 : i32
    %c0_i32_0 = arith.constant 0 : i32
    return %c0_i32, %arg1 : i32, i32
  }
  func.func @transform_3(%arg0: i32, %arg1: i32) -> (i32, i32) {
    %c0_i32 = arith.constant 0 : i32
    return %arg0, %arg1 : i32, i32
  }
}

</mosaic_0001>

<llo_original>
// kernel: tpu_custom_call.1
$region0: #{tpu_custom_call.1}
  #allocation0 [shape = 'u32[]', space=smem, size = 0x4, offset = 0x4, fixed_abs, tag = 'smem constant byte address 0x4 - core index']
  #allocation1 [shape = 'u32[144,128]{1,0:T(1,128)}', space=vmem, size = 0x12000, scoped, tag = 'internal scratch']
  %s0 = inlined_call_operand.vmem [shape: f32[512,32], index: 0, kind: input, shape index: {}]
  %s1 = inlined_call_operand.vmem [shape: f32[32,96], index: 1, kind: input, shape index: {}]
  %s2 = inlined_call_operand.vmem [shape: f32[1,96], index: 2, kind: input, shape index: {}]
  %s3 = inlined_call_operand.vmem [shape: f32[512,96], index: 3, kind: output, shape index: {}]
  %s4 = sld [smem:[#allocation0]]
  $region45: #{tpu_custom_call.1} parent=0
    _
  %s6 = ssub.s32 1, %s4
  %s7 = scalar_select 0, %s6, %s4
  loop: start=0, step=1, limit=4
  $region2: #{tpu_custom_call.1} parent=0 // loop_pre_header
    _
  $region3: #{tpu_custom_call.1} parent=0 // loop_header
    %s9 = sphi 0, %s13
    %p10 = scmp.ge.s32.totalorder %s9, 4
    %s16 = sphi 0, %s28
    %s17 = sphi 0, %s24
    %s18 = sphi 0, %s16
    %s19 = sphi 0, %s17
    %s20 = sphi 0, %s18
    %s21 = sphi 0, %s19
    %s31 = sphi 0, %s33
    %s34 = sphi 0, %s31
    %s35 = sphi 0, %s34
    %s51 = sphi 0, %s35
    %s57 = sphi 0, %s59
    %s60 = sphi 0, %s57
    %s61 = sphi 0, %s60
    %s77 = sphi 0, %s61
    %s83 = sphi 0, %s85
    %s86 = sphi 0, %s83
    %s87 = sphi 0, %s86
    %s103 = sphi 0, %s87
    %s111 = sphi 0, %s113
    %s114 = sphi 0, %s111
    %s115 = sphi 0, %s114
    %s131 = sphi 0, %s115
  $region4: #{tpu_custom_call.1} parent=0 // loop_header_branch
    %12 = sbr.rel (%p10) target = $region8
  $region5: #{tpu_custom_call.1} parent=0 // loop_body
    %s14 = ssub.s32 %s9, 1
    %s15 = ssub.s32 %s9, 2
    %s22 = sadd.s32 1, %s17
    %p23 = scmp.ge.s32.totalorder %s22, 1
    %s24 = scalar_select %p23, 0, %s22
    %s25 = sadd.s32 1, %s16
    %s26 = scalar_select %p23, %s25, %s16
    %p27 = scmp.ge.s32.totalorder %s26, 2
    %s28 = scalar_select %p27, 0, %s26
    %s29 = ssub.s32 %s16, %s28
    %p30 = scmp.eq.s32.totalorder %s29, 0
    %s32 = sadd.s32 %s31, 1
    %s33 = scalar_select %p30, %s31, %s32
    %p36 = pneg %p30
    %p37 = scmp.eq.s32.totalorder %s9, 1
    %p38 = por %p36, %p37
    %p39 = scmp.ne.s32.totalorder %s31, %s34
    %p40 = scmp.eq.s32.totalorder %s9, 0
    %p41 = por %p39, %p40
    %p42 = scmp.ne.s32.totalorder %s31, %s34
    %p43 = scmp.eq.s32.totalorder %s14, 1
    %p44 = por %p42, %p43
    %p45 = scmp.ne.s32.totalorder %s34, %s35
    %p46 = scmp.eq.s32.totalorder %s14, 0
    %p47 = por %p45, %p46
    %p48 = scmp.ne.s32.totalorder %s34, %s35
    %p49 = scmp.eq.s32.totalorder %s15, 1
    %p50 = por %p48, %p49
    %p52 = scmp.ne.s32.totalorder %s35, %s51
    %p53 = scmp.eq.s32.totalorder %s15, 0
    %p54 = por %p52, %p53
    %s55 = ssub.s32 %s17, %s24
    %p56 = scmp.eq.s32.totalorder %s55, 0
    %s58 = sadd.s32 %s57, 1
    %s59 = scalar_select %p56, %s57, %s58
    %p62 = pneg %p56
    %p63 = scmp.eq.s32.totalorder %s9, 1
    %p64 = por %p62, %p63
    %p65 = scmp.ne.s32.totalorder %s57, %s60
    %p66 = scmp.eq.s32.totalorder %s9, 0
    %p67 = por %p65, %p66
    %p68 = scmp.ne.s32.totalorder %s57, %s60
    %p69 = scmp.eq.s32.totalorder %s14, 1
    %p70 = por %p68, %p69
    %p71 = scmp.ne.s32.totalorder %s60, %s61
    %p72 = scmp.eq.s32.totalorder %s14, 0
    %p73 = por %p71, %p72
    %p74 = scmp.ne.s32.totalorder %s60, %s61
    %p75 = scmp.eq.s32.totalorder %s15, 1
    %p76 = por %p74, %p75
    %p78 = scmp.ne.s32.totalorder %s61, %s77
    %p79 = scmp.eq.s32.totalorder %s15, 0
    %p80 = por %p78, %p79
    %s81 = ssub.s32 %s17, %s24
    %p82 = scmp.eq.s32.totalorder %s81, 0
    %s84 = sadd.s32 %s83, 1
    %s85 = scalar_select %p82, %s83, %s84
    %p88 = pneg %p82
    %p89 = scmp.eq.s32.totalorder %s9, 1
    %p90 = por %p88, %p89
    %p91 = scmp.ne.s32.totalorder %s83, %s86
    %p92 = scmp.eq.s32.totalorder %s9, 0
    %p93 = por %p91, %p92
    %p94 = scmp.ne.s32.totalorder %s83, %s86
    %p95 = scmp.eq.s32.totalorder %s14, 1
    %p96 = por %p94, %p95
    %p97 = scmp.ne.s32.totalorder %s86, %s87
    %p98 = scmp.eq.s32.totalorder %s14, 0
    %p99 = por %p97, %p98
    %p100 = scmp.ne.s32.totalorder %s86, %s87
    %p101 = scmp.eq.s32.totalorder %s15, 1
    %p102 = por %p100, %p101
    %p104 = scmp.ne.s32.totalorder %s87, %s103
    %p105 = scmp.eq.s32.totalorder %s15, 0
    %p106 = por %p104, %p105
    %s107 = ssub.s32 %s16, %s28
    %s108 = ssub.s32 %s17, %s24
    %s109 = sor.u32 %s107, %s108
    %p110 = scmp.eq.s32.totalorder %s109, 0
    %s112 = sadd.s32 %s111, 1
    %s113 = scalar_select %p110, %s111, %s112
    %p116 = pneg %p110
    %p117 = scmp.eq.s32.totalorder %s9, 1
    %p118 = por %p116, %p117
    %p119 = scmp.ne.s32.totalorder %s111, %s114
    %p120 = scmp.eq.s32.totalorder %s9, 0
    %p121 = por %p119, %p120
    %p122 = scmp.ne.s32.totalorder %s111, %s114
    %p123 = scmp.eq.s32.totalorder %s14, 1
    %p124 = por %p122, %p123
    %p125 = scmp.ne.s32.totalorder %s114, %s115
    %p126 = scmp.eq.s32.totalorder %s14, 0
    %p127 = por %p125, %p126
    %p128 = scmp.ne.s32.totalorder %s114, %s115
    %p129 = scmp.eq.s32.totalorder %s15, 1
    %p130 = por %p128, %p129
    %p132 = scmp.ne.s32.totalorder %s115, %s131
    %p133 = scmp.eq.s32.totalorder %s15, 0
    %p134 = por %p132, %p133
    %p135 = scmp.le.s32.totalorder 1, %s9
    %p136 = scmp.lt.s32.totalorder %s9, 3
    %p137 = pnand %p135, %p136
    %p138 = pneg %p137
    // Predicated region
    $region9: #{tpu_custom_call.1} parent=5 // pred_check
      _
    $region10: #{tpu_custom_call.1} parent=5 // pred_check_branch
      %140 = sbr.rel (%p137) target = $region12
    $region11: #{tpu_custom_call.1} parent=5 // pred_region
      %s141 = ssub.s32 %s9, 1
      // Predicated region
      $region13: #{tpu_custom_call.1} parent=11 // pred_check
        %p142 = pneg %p73
      $region14: #{tpu_custom_call.1} parent=11 // pred_check_branch
        %144 = sbr.rel (%p142) target = $region16
      $region15: #{tpu_custom_call.1} parent=11 // pred_region
        %p145 = scmp.lt.s32.totalorder %s19, 0
        %s146 = scalar_select %p145, %s19, 0
        %s147 = smul.addr %s146, 8
        %s148 = scalar_lea.vmem %s1, %s147
      $region16: #{tpu_custom_call.1} parent=11 // pred_fallthru
        _
      // Predicated region
      $region17: #{tpu_custom_call.1} parent=11 // pred_check
        %p149 = pneg %p99
      $region18: #{tpu_custom_call.1} parent=11 // pred_check_branch
        %151 = sbr.rel (%p149) target = $region20
      $region19: #{tpu_custom_call.1} parent=11 // pred_region
        %p152 = scmp.lt.s32.totalorder %s19, 0
        %s153 = scalar_select %p152, %s19, 0
        %s154 = scalar_lea.vmem %s2, %s153
      $region20: #{tpu_custom_call.1} parent=11 // pred_fallthru
        _
    $region12: #{tpu_custom_call.1} parent=5 // pred_fallthru
      _
    %p155 = scmp.lt.s32.totalorder %s9, 2
    // Predicated region
    $region21: #{tpu_custom_call.1} parent=5 // pred_check
      %p156 = pneg %p155
    $region22: #{tpu_custom_call.1} parent=5 // pred_check_branch
      %158 = sbr.rel (%p156) target = $region24
    $region23: #{tpu_custom_call.1} parent=5 // pred_region
      // Predicated region
      $region25: #{tpu_custom_call.1} parent=23 // pred_check
        %p159 = pneg %p41
      $region26: #{tpu_custom_call.1} parent=23 // pred_check_branch
        %161 = sbr.rel (%p159) target = $region28
      $region27: #{tpu_custom_call.1} parent=23 // pred_region
        %s162 = smul.u32 32, %s16
        %p163 = scmp.lt.s32.totalorder %s162, 63
        %s164 = scalar_select %p163, %s162, 63
        %s165 = smul.addr %s164, 8
        %s166 = scalar_lea.vmem %s0, %s165
        %s167 = smul.u32 32, %s16
      $region28: #{tpu_custom_call.1} parent=23 // pred_fallthru
        _
    $region24: #{tpu_custom_call.1} parent=5 // pred_fallthru
      _
    %p168 = scmp.le.s32.totalorder 1, %s9
    %p169 = scmp.lt.s32.totalorder %s9, 3
    %p170 = pnand %p168, %p169
    %p171 = pneg %p170
    // Predicated region
    $region29: #{tpu_custom_call.1} parent=5 // pred_check
      _
    $region30: #{tpu_custom_call.1} parent=5 // pred_check_branch
      %173 = sbr.rel (%p170) target = $region32
    $region31: #{tpu_custom_call.1} parent=5 // pred_region
      %s174 = ssub.s32 %s9, 1
      %s175 = smul.u32 32, %s18
      %p176 = scmp.lt.s32.totalorder %s175, 63
      %s177 = scalar_select %p176, %s175, 63
      %s178 = smul.addr %s177, 8
      %s179 = scalar_lea.vmem %s0, %s178
      %p180 = pneg %p47
      %p181 = pneg %p44
      %p182 = scmp.lt.s32.totalorder %s19, 0
      %s183 = scalar_select %p182, %s19, 0
      %s184 = smul.addr %s183, 8
      %s185 = scalar_lea.vmem %s1, %s184
      %p186 = pneg %p73
      %p187 = pneg %p70
      %p188 = scmp.lt.s32.totalorder %s19, 0
      %s189 = scalar_select %p188, %s19, 0
      %s190 = scalar_lea.vmem %s2, %s189
      %p191 = pneg %p99
      %p192 = pneg %p96
      %p193 = pneg %p127
      %p194 = pneg %p124
      %s195 = smul.u32 32, %s18
      %p196 = scmp.lt.s32.totalorder %s195, 63
      %s197 = scalar_select %p196, %s195, 63
      %p198 = scmp.lt.s32.totalorder %s19, 0
      %s199 = scalar_select %p198, %s19, 0
      %s200 = sadd.s32 %s199, %s197
      %s201 = smul.addr %s200, 8
      %s202 = scalar_lea.vmem %s3, %s201
      %s203 = smul.u32 32, %s18
      %p204 = scmp.lt.s32.totalorder %s203, 63
      %s205 = scalar_select %p204, %s203, 63
      %s206 = smul.addr %s205, 8
      %s207 = scalar_lea.vmem %s0, %s206
      %s208 = smul.u32 32, %s18
      %p209 = scmp.lt.s32.totalorder %s19, 0
      %s210 = scalar_select %p209, %s19, 0
      %s211 = smul.addr %s210, 8
      %s212 = scalar_lea.vmem %s1, %s211
      %p213 = scmp.lt.s32.totalorder %s19, 0
      %s214 = scalar_select %p213, %s19, 0
      %s215 = scalar_lea.vmem %s2, %s214
      %s216 = smul.u32 32, %s18
      %p217 = scmp.lt.s32.totalorder %s216, 63
      %s218 = scalar_select %p217, %s216, 63
      %p219 = scmp.lt.s32.totalorder %s19, 0
      %s220 = scalar_select %p219, %s19, 0
      %s221 = sadd.s32 %s220, %s218
      %s222 = smul.addr %s221, 8
      %s223 = scalar_lea.vmem %s3, %s222
      %s224 = smul.u32 32, %s18
      %v226 = vld [vmem:[%s207] sm:$0xff]
      %v227 = vld [vmem:[%s207 + $0x8] sm:$0xff]
      %v228 = vld [vmem:[%s207 + $0x10] sm:$0xff]
      %v229 = vld [vmem:[%s207 + $0x18] sm:$0xff]
      %v230 = vld [vmem:[%s207 + $0x20] sm:$0xff]
      %v231 = vld [vmem:[%s207 + $0x28] sm:$0xff]
      %v232 = vld [vmem:[%s207 + $0x30] sm:$0xff]
      %v233 = vld [vmem:[%s207 + $0x38] sm:$0xff]
      %v234 = vld [vmem:[%s207 + $0x40] sm:$0xff]
      %v235 = vld [vmem:[%s207 + $0x48] sm:$0xff]
      %v236 = vld [vmem:[%s207 + $0x50] sm:$0xff]
      %v237 = vld [vmem:[%s207 + $0x58] sm:$0xff]
      %v238 = vld [vmem:[%s207 + $0x60] sm:$0xff]
      %v239 = vld [vmem:[%s207 + $0x68] sm:$0xff]
      %v240 = vld [vmem:[%s207 + $0x70] sm:$0xff]
      %v241 = vld [vmem:[%s207 + $0x78] sm:$0xff]
      %v242 = vld [vmem:[%s207 + $0x80] sm:$0xff]
      %v243 = vld [vmem:[%s207 + $0x88] sm:$0xff]
      %v244 = vld [vmem:[%s207 + $0x90] sm:$0xff]
      %v245 = vld [vmem:[%s207 + $0x98] sm:$0xff]
      %v246 = vld [vmem:[%s207 + $0xa0] sm:$0xff]
      %v247 = vld [vmem:[%s207 + $0xa8] sm:$0xff]
      %v248 = vld [vmem:[%s207 + $0xb0] sm:$0xff]
      %v249 = vld [vmem:[%s207 + $0xb8] sm:$0xff]
      %v250 = vld [vmem:[%s207 + $0xc0] sm:$0xff]
      %v251 = vld [vmem:[%s207 + $0xc8] sm:$0xff]
      %v252 = vld [vmem:[%s207 + $0xd0] sm:$0xff]
      %v253 = vld [vmem:[%s207 + $0xd8] sm:$0xff]
      %v254 = vld [vmem:[%s207 + $0xe0] sm:$0xff]
      %v255 = vld [vmem:[%s207 + $0xe8] sm:$0xff]
      %v256 = vld [vmem:[%s207 + $0xf0] sm:$0xff]
      %v257 = vld [vmem:[%s207 + $0xf8] sm:$0xff]
      %v258 = vpack.c.bf16 %v227, %v226
      %v259 = vpack.c.bf16 %v229, %v228
      %v260 = vpack.c.bf16 %v231, %v230
      %v261 = vpack.c.bf16 %v233, %v232
      %v262 = vpack.c.bf16 %v235, %v234
      %v263 = vpack.c.bf16 %v237, %v236
      %v264 = vpack.c.bf16 %v239, %v238
      %v265 = vpack.c.bf16 %v241, %v240
      %v266 = vpack.c.bf16 %v243, %v242
      %v267 = vpack.c.bf16 %v245, %v244
      %v268 = vpack.c.bf16 %v247, %v246
      %v269 = vpack.c.bf16 %v249, %v248
      %v270 = vpack.c.bf16 %v251, %v250
      %v271 = vpack.c.bf16 %v253, %v252
      %v272 = vpack.c.bf16 %v255, %v254
      %v273 = vpack.c.bf16 %v257, %v256
      %v274 = vld [vmem:[%s212] sm:$0xff]
      %v275 = vld [vmem:[%s212 + $0x8] sm:$0xff]
      %v276 = vld [vmem:[%s212 + $0x10] sm:$0xff]
      %v277 = vld [vmem:[%s212 + $0x18] sm:$0xff]
      %v278 = vpack.c.bf16 %v275, %v274
      %v279 = vpack.c.bf16 %v277, %v276
      %v280 = vld [vmem:[%s215] sm:$0x1]
      %v282 = vlaneseq
      %v283 = vshrl.u32 %v282, 7
      %v284 = vsub.s32 0, %v283
      %v285 = vrot.slane %v280, %v284
      %vm287 = vcmask 261120
      %v289 = vsel %vm287, %v258, 0
      %v292 = vsel %vm287, %v259, 0
      %v295 = vsel %vm287, %v260, 0
      %v298 = vsel %vm287, %v261, 0
      %v301 = vsel %vm287, %v262, 0
      %v304 = vsel %vm287, %v263, 0
      %v307 = vsel %vm287, %v264, 0
      %v310 = vsel %vm287, %v265, 0
      %v313 = vsel %vm287, %v266, 0
      %v316 = vsel %vm287, %v267, 0
      %v319 = vsel %vm287, %v268, 0
      %v322 = vsel %vm287, %v269, 0
      %v325 = vsel %vm287, %v270, 0
      %v328 = vsel %vm287, %v271, 0
      %v331 = vsel %vm287, %v272, 0
      %v334 = vsel %vm287, %v273, 0
      %336 = vmatprep.subr.bf16.mxu0 0
      %337 = vmatpush1.bf16.msra.mxu0 0
      %338 = vmatprep.subr.bf16.mxu0 0
      %339 = vmatpush1.bf16.msra.mxu0 0
      %340 = vmatprep.subr.bf16.mxu0 0
      %341 = vmatpush1.bf16.msra.mxu0 0
      %342 = vmatprep.subr.bf16.mxu0 0
      %343 = vmatpush1.bf16.msra.mxu0 0
      %344 = vmatprep.subr.bf16.mxu0 0
      %345 = vmatpush1.bf16.msra.mxu0 0
      %346 = vmatprep.subr.bf16.mxu0 0
      %347 = vmatpush1.bf16.msra.mxu0 0
      %348 = vmatprep.subr.bf16.mxu0 0
      %349 = vmatpush1.bf16.msra.mxu0 %v279
      %350 = vmatprep.subr.bf16.mxu0 0
      %351 = vmatpush1.bf16.msra.mxu0 %v278
      %352 = vmatprep.subr.bf16.mxu0 0
      %353 = vmatpush2.bf16.msra.mxu0 0
      %354 = vmatprep.subr.bf16.mxu0 0
      %355 = vmatpush2.bf16.msra.mxu0 0
      %356 = vmatprep.subr.bf16.mxu0 0
      %357 = vmatpush2.bf16.msra.mxu0 0
      %358 = vmatprep.subr.bf16.mxu0 0
      %359 = vmatpush2.bf16.msra.mxu0 0
      %360 = vmatprep.subr.bf16.mxu0 0
      %361 = vmatpush2.bf16.msra.mxu0 0
      %362 = vmatprep.subr.bf16.mxu0 0
      %363 = vmatpush2.bf16.msra.mxu0 0
      %364 = vmatprep.subr.bf16.mxu0 0
      %365 = vmatpush2.bf16.msra.mxu0 0
      %366 = vmatprep.subr.bf16.mxu0 0
      %367 = vmatpush2.bf16.msra.mxu0 0
      %368 = vmatprep.mubr.bf16.mxu0 0
      %369 = vmatmul.mubr.bf16.gmra.mxu0 %v289
      %v370 = vpop.f32.mrf.mxu0
      %v371 = vadd.f32 %v285, %v370
      %v372 = vpop.f32.mrf.mxu0
      %v373 = vpop.f32.mrf.mxu0
      %v374 = vadd.f32 %v285, %v373
      %v375 = vpop.f32.mrf.mxu0
      %376 = vmatprep.mubr.bf16.mxu0 0
      %377 = vmatmul.mubr.bf16.gmra.mxu0 %v292
      %v378 = vpop.f32.mrf.mxu0
      %v379 = vadd.f32 %v285, %v378
      %v380 = vpop.f32.mrf.mxu0
      %v381 = vpop.f32.mrf.mxu0
      %v382 = vadd.f32 %v285, %v381
      %v383 = vpop.f32.mrf.mxu0
      %384 = vmatprep.mubr.bf16.mxu0 0
      %385 = vmatmul.mubr.bf16.gmra.mxu0 %v295
      %v386 = vpop.f32.mrf.mxu0
      %v387 = vadd.f32 %v285, %v386
      %v388 = vpop.f32.mrf.mxu0
      %v389 = vpop.f32.mrf.mxu0
      %v390 = vadd.f32 %v285, %v389
      %v391 = vpop.f32.mrf.mxu0
      %392 = vmatprep.mubr.bf16.mxu0 0
      %393 = vmatmul.mubr.bf16.gmra.mxu0 %v298
      %v394 = vpop.f32.mrf.mxu0
      %v395 = vadd.f32 %v285, %v394
      %v396 = vpop.f32.mrf.mxu0
      %v397 = vpop.f32.mrf.mxu0
      %v398 = vadd.f32 %v285, %v397
      %v399 = vpop.f32.mrf.mxu0
      %400 = vmatprep.mubr.bf16.mxu0 0
      %401 = vmatmul.mubr.bf16.gmra.mxu0 %v301
      %v402 = vpop.f32.mrf.mxu0
      %v403 = vadd.f32 %v285, %v402
      %v404 = vpop.f32.mrf.mxu0
      %v405 = vpop.f32.mrf.mxu0
      %v406 = vadd.f32 %v285, %v405
      %v407 = vpop.f32.mrf.mxu0
      %408 = vmatprep.mubr.bf16.mxu0 0
      %409 = vmatmul.mubr.bf16.gmra.mxu0 %v304
      %v410 = vpop.f32.mrf.mxu0
      %v411 = vadd.f32 %v285, %v410
      %v412 = vpop.f32.mrf.mxu0
      %v413 = vpop.f32.mrf.mxu0
      %v414 = vadd.f32 %v285, %v413
      %v415 = vpop.f32.mrf.mxu0
      %416 = vmatprep.mubr.bf16.mxu0 0
      %417 = vmatmul.mubr.bf16.gmra.mxu0 %v307
      %v418 = vpop.f32.mrf.mxu0
      %v419 = vadd.f32 %v285, %v418
      %v420 = vpop.f32.mrf.mxu0
      %v421 = vpop.f32.mrf.mxu0
      %v422 = vadd.f32 %v285, %v421
      %v423 = vpop.f32.mrf.mxu0
      %424 = vmatprep.mubr.bf16.mxu0 0
      %425 = vmatmul.mubr.bf16.gmra.mxu0 %v310
      %v426 = vpop.f32.mrf.mxu0
      %v427 = vadd.f32 %v285, %v426
      %v428 = vpop.f32.mrf.mxu0
      %v429 = vpop.f32.mrf.mxu0
      %v430 = vadd.f32 %v285, %v429
      %v431 = vpop.f32.mrf.mxu0
      %432 = vmatprep.mubr.bf16.mxu0 0
      %433 = vmatmul.mubr.bf16.gmra.mxu0 %v313
      %v434 = vpop.f32.mrf.mxu0
      %v435 = vadd.f32 %v285, %v434
      %v436 = vpop.f32.mrf.mxu0
      %v437 = vpop.f32.mrf.mxu0
      %v438 = vadd.f32 %v285, %v437
      %v439 = vpop.f32.mrf.mxu0
      %440 = vmatprep.mubr.bf16.mxu0 0
      %441 = vmatmul.mubr.bf16.gmra.mxu0 %v316
      %v442 = vpop.f32.mrf.mxu0
      %v443 = vadd.f32 %v285, %v442
      %v444 = vpop.f32.mrf.mxu0
      %v445 = vpop.f32.mrf.mxu0
      %v446 = vadd.f32 %v285, %v445
      %v447 = vpop.f32.mrf.mxu0
      %448 = vmatprep.mubr.bf16.mxu0 0
      %449 = vmatmul.mubr.bf16.gmra.mxu0 %v319
      %v450 = vpop.f32.mrf.mxu0
      %v451 = vadd.f32 %v285, %v450
      %v452 = vpop.f32.mrf.mxu0
      %v453 = vpop.f32.mrf.mxu0
      %v454 = vadd.f32 %v285, %v453
      %v455 = vpop.f32.mrf.mxu0
      %456 = vmatprep.mubr.bf16.mxu0 0
      %457 = vmatmul.mubr.bf16.gmra.mxu0 %v322
      %v458 = vpop.f32.mrf.mxu0
      %v459 = vadd.f32 %v285, %v458
      %v460 = vpop.f32.mrf.mxu0
      %v461 = vpop.f32.mrf.mxu0
      %v462 = vadd.f32 %v285, %v461
      %v463 = vpop.f32.mrf.mxu0
      %464 = vmatprep.mubr.bf16.mxu0 0
      %465 = vmatmul.mubr.bf16.gmra.mxu0 %v325
      %v466 = vpop.f32.mrf.mxu0
      %v467 = vadd.f32 %v285, %v466
      %v468 = vpop.f32.mrf.mxu0
      %v469 = vpop.f32.mrf.mxu0
      %v470 = vadd.f32 %v285, %v469
      %v471 = vpop.f32.mrf.mxu0
      %472 = vmatprep.mubr.bf16.mxu0 0
      %473 = vmatmul.mubr.bf16.gmra.mxu0 %v328
      %v474 = vpop.f32.mrf.mxu0
      %v475 = vadd.f32 %v285, %v474
      %v476 = vpop.f32.mrf.mxu0
      %v477 = vpop.f32.mrf.mxu0
      %v478 = vadd.f32 %v285, %v477
      %v479 = vpop.f32.mrf.mxu0
      %480 = vmatprep.mubr.bf16.mxu0 0
      %481 = vmatmul.mubr.bf16.gmra.mxu0 %v331
      %v482 = vpop.f32.mrf.mxu0
      %v483 = vadd.f32 %v285, %v482
      %v484 = vpop.f32.mrf.mxu0
      %v485 = vpop.f32.mrf.mxu0
      %v486 = vadd.f32 %v285, %v485
      %v487 = vpop.f32.mrf.mxu0
      %488 = vmatprep.mubr.bf16.mxu0 0
      %489 = vmatmul.mubr.bf16.gmra.mxu0 %v334
      %v490 = vpop.f32.mrf.mxu0
      %v491 = vadd.f32 %v285, %v490
      %v492 = vpop.f32.mrf.mxu0
      %v493 = vpop.f32.mrf.mxu0
      %v494 = vadd.f32 %v285, %v493
      %v495 = vpop.f32.mrf.mxu0
      %496 = vdwg.mxu0
      %vm497 = vcmask 785408
      %498 = vst.msk [vmem:[%s223] sm:$0xff] %vm497, %v371
      %499 = vst.msk [vmem:[%s223 + $0x8] sm:$0xff] %vm497, %v374
      %500 = vst.msk [vmem:[%s223 + $0x10] sm:$0xff] %vm497, %v379
      %501 = vst.msk [vmem:[%s223 + $0x18] sm:$0xff] %vm497, %v382
      %502 = vst.msk [vmem:[%s223 + $0x20] sm:$0xff] %vm497, %v387
      %503 = vst.msk [vmem:[%s223 + $0x28] sm:$0xff] %vm497, %v390
      %504 = vst.msk [vmem:[%s223 + $0x30] sm:$0xff] %vm497, %v395
      %505 = vst.msk [vmem:[%s223 + $0x38] sm:$0xff] %vm497, %v398
      %506 = vst.msk [vmem:[%s223 + $0x40] sm:$0xff] %vm497, %v403
      %507 = vst.msk [vmem:[%s223 + $0x48] sm:$0xff] %vm497, %v406
      %508 = vst.msk [vmem:[%s223 + $0x50] sm:$0xff] %vm497, %v411
      %509 = vst.msk [vmem:[%s223 + $0x58] sm:$0xff] %vm497, %v414
      %510 = vst.msk [vmem:[%s223 + $0x60] sm:$0xff] %vm497, %v419
      %511 = vst.msk [vmem:[%s223 + $0x68] sm:$0xff] %vm497, %v422
      %512 = vst.msk [vmem:[%s223 + $0x70] sm:$0xff] %vm497, %v427
      %513 = vst.msk [vmem:[%s223 + $0x78] sm:$0xff] %vm497, %v430
      %514 = vst.msk [vmem:[%s223 + $0x80] sm:$0xff] %vm497, %v435
      %515 = vst.msk [vmem:[%s223 + $0x88] sm:$0xff] %vm497, %v438
      %516 = vst.msk [vmem:[%s223 + $0x90] sm:$0xff] %vm497, %v443
      %517 = vst.msk [vmem:[%s223 + $0x98] sm:$0xff] %vm497, %v446
      %518 = vst.msk [vmem:[%s223 + $0xa0] sm:$0xff] %vm497, %v451
      %519 = vst.msk [vmem:[%s223 + $0xa8] sm:$0xff] %vm497, %v454
      %520 = vst.msk [vmem:[%s223 + $0xb0] sm:$0xff] %vm497, %v459
      %521 = vst.msk [vmem:[%s223 + $0xb8] sm:$0xff] %vm497, %v462
      %522 = vst.msk [vmem:[%s223 + $0xc0] sm:$0xff] %vm497, %v467
      %523 = vst.msk [vmem:[%s223 + $0xc8] sm:$0xff] %vm497, %v470
      %524 = vst.msk [vmem:[%s223 + $0xd0] sm:$0xff] %vm497, %v475
      %525 = vst.msk [vmem:[%s223 + $0xd8] sm:$0xff] %vm497, %v478
      %526 = vst.msk [vmem:[%s223 + $0xe0] sm:$0xff] %vm497, %v483
      %527 = vst.msk [vmem:[%s223 + $0xe8] sm:$0xff] %vm497, %v486
      %528 = vst.msk [vmem:[%s223 + $0xf0] sm:$0xff] %vm497, %v491
      %529 = vst.msk [vmem:[%s223 + $0xf8] sm:$0xff] %vm497, %v494
      %s530 = smul.u32 32, %s18
      %p531 = scmp.lt.s32.totalorder %s530, 63
      %s532 = scalar_select %p531, %s530, 63
      %p533 = scmp.lt.s32.totalorder %s19, 0
      %s534 = scalar_select %p533, %s19, 0
      %s535 = sadd.s32 %s534, %s532
      %s536 = smul.addr %s535, 8
      %s537 = scalar_lea.vmem %s3, %s536
      // Predicated region
      $region33: #{tpu_custom_call.1} parent=31 // pred_check
        %p538 = pneg %p124
      $region34: #{tpu_custom_call.1} parent=31 // pred_check_branch
        %540 = sbr.rel (%p538) target = $region36
      $region35: #{tpu_custom_call.1} parent=31 // pred_region
        %s541 = smul.u32 32, %s18
      $region36: #{tpu_custom_call.1} parent=31 // pred_fallthru
        _
    $region32: #{tpu_custom_call.1} parent=5 // pred_fallthru
      _
    %p542 = scmp.le.s32.totalorder 2, %s9
    // Predicated region
    $region37: #{tpu_custom_call.1} parent=5 // pred_check
      %p543 = pneg %p542
    $region38: #{tpu_custom_call.1} parent=5 // pred_check_branch
      %545 = sbr.rel (%p543) target = $region40
    $region39: #{tpu_custom_call.1} parent=5 // pred_region
      %s546 = ssub.s32 %s9, 2
      // Predicated region
      $region41: #{tpu_custom_call.1} parent=39 // pred_check
        %p547 = pneg %p130
      $region42: #{tpu_custom_call.1} parent=39 // pred_check_branch
        %549 = sbr.rel (%p547) target = $region44
      $region43: #{tpu_custom_call.1} parent=39 // pred_region
        %s550 = smul.u32 32, %s20
        %p551 = scmp.lt.s32.totalorder %s550, 63
        %s552 = scalar_select %p551, %s550, 63
        %p553 = scmp.lt.s32.totalorder %s21, 0
        %s554 = scalar_select %p553, %s21, 0
        %s555 = sadd.s32 %s554, %s552
        %s556 = smul.addr %s555, 8
        %s557 = scalar_lea.vmem %s3, %s556
      $region44: #{tpu_custom_call.1} parent=39 // pred_fallthru
        _
    $region40: #{tpu_custom_call.1} parent=5 // pred_fallthru
      _
  $region6: #{tpu_custom_call.1} parent=0 // loop_footer
    %s13 = sadd.s32 1, %s9
  $region7: #{tpu_custom_call.1} parent=0 // loop_footer_branch
    %8 = sbr.rel target = $region3
  $region8: #{tpu_custom_call.1} parent=0 // loop_exit
    _

</llo_original>
